<compile_context>
chip_gen: v5e
topology: v5e:2x2
jax: 0.10.0
libtpu: 0.0.40
codegen_flags: <defaults>
</compile_context>

<pallas_src>
import functools

import jax
import jax.numpy as jnp
from jax.experimental import pallas as pl
from jax.experimental.pallas import tpu as pltpu


def _round_up(x, m):
    return ((x + m - 1) // m) * m


# ---------------------------------------------------------------------------
# Kernel 1: softmax cross-entropy with ignore_index (NCHW-native layout)
#   logits block: (1, C, TC)  -- classes on sublanes, spatial on lanes
#   labels block: (1, 1, TC)
#   outputs: per-image, per-lane partial loss sums / valid counts (resident
#   accumulators across the spatial-tile grid axis).
# ---------------------------------------------------------------------------
def _ce_kernel(logits_ref, labels_ref, lsum_ref, csum_ref, *, ignore_index):
    @pl.when(pl.program_id(1) == 0)
    def _init():
        lsum_ref[...] = jnp.zeros_like(lsum_ref)
        csum_ref[...] = jnp.zeros_like(csum_ref)

    logits = logits_ref[0].astype(jnp.float32)        # (C, TC)
    labels = labels_ref[0]                            # (1, TC) int32

    # log-softmax over the class (sublane) axis
    m = jnp.max(logits, axis=0, keepdims=True)                    # (1, TC)
    z = logits - m
    lse = jnp.log(jnp.sum(jnp.exp(z), axis=0, keepdims=True))     # (1, TC)

    # gather the target-class shifted logit via one-hot (no dynamic gather)
    class_ids = jax.lax.broadcasted_iota(jnp.int32, logits.shape, 0)
    onehot = (class_ids == labels).astype(jnp.float32)            # (C, TC)
    picked_z = jnp.sum(onehot * z, axis=0, keepdims=True)         # (1, TC)

    nll = lse - picked_z                                          # (1, TC)
    valid = (labels != ignore_index).astype(jnp.float32)          # (1, TC)

    # lane-dense partial accumulation; cross-lane reduce deferred to wrapper
    lsum_ref[0] += nll * valid
    csum_ref[0] += valid


def _pick_ce_tile_cols(C, HW, target_bytes=1 << 20, max_block_bytes=4 << 20):
    """Pick a spatial tile width (multiple of 128) moving ~target_bytes/step."""
    bytes_per_col = 4 * C
    hw128 = _round_up(HW, 128)
    max_cols = max(128, (max_block_bytes // bytes_per_col) // 128 * 128)
    target = min(hw128, max_cols,
                 max(128, _round_up(target_bytes // bytes_per_col, 128)))
    # Prefer a width that exactly divides the 128-padded spatial extent so no
    # column padding (extra HBM copy) is needed.
    n_chunks = hw128 // 128
    best = None
    for d in range(1, n_chunks + 1):
        cols = 128 * d
        if n_chunks % d == 0 and cols <= max_cols:
            if best is None or abs(cols - target) < abs(best - target):
                best = cols
    if best is not None and 4 * best >= target:
        return best
    return target


def cross_entropy_seg_loss(pred, target, ignore_index=255, tile_cols=None):
    """pred: (N, C, H, W) float logits; target: (N, H, W) integer labels."""
    N, C, H, W = pred.shape
    HW = H * W
    logits = pred.reshape(N, C, HW)                       # free reshape
    labels = target.reshape(N, 1, HW).astype(jnp.int32)

    if tile_cols is None:
        tile_cols = _pick_ce_tile_cols(C, HW)
    HWp = _round_up(HW, tile_cols)
    if HWp != HW:
        logits = jnp.pad(logits, ((0, 0), (0, 0), (0, HWp - HW)))
        labels = jnp.pad(labels, ((0, 0), (0, 0), (0, HWp - HW)),
                         constant_values=ignore_index)

    grid = (N, HWp // tile_cols)
    lsum, csum = pl.pallas_call(
        functools.partial(_ce_kernel, ignore_index=ignore_index),
        out_shape=(jax.ShapeDtypeStruct((N, 1, tile_cols), jnp.float32),
                   jax.ShapeDtypeStruct((N, 1, tile_cols), jnp.float32)),
        grid=grid,
        in_specs=[pl.BlockSpec((1, C, tile_cols), lambda n, j: (n, 0, j)),
                  pl.BlockSpec((1, 1, tile_cols), lambda n, j: (n, 0, j))],
        out_specs=(pl.BlockSpec((1, 1, tile_cols), lambda n, j: (n, 0, 0)),
                   pl.BlockSpec((1, 1, tile_cols), lambda n, j: (n, 0, 0))),
        compiler_params=pltpu.CompilerParams(
            dimension_semantics=("parallel", "arbitrary")),
    )(logits, labels)

    loss_sum = jnp.sum(lsum)
    valid_cnt = jnp.sum(csum)
    # NOTE: returns 0.0 (not NaN like PyTorch) when every pixel is ignore_index.
    return loss_sum / jnp.maximum(valid_cnt, 1.0)


# ---------------------------------------------------------------------------
# Kernel 2: BCE-with-logits, mean reduction.
#   (tile_rows, 128) tiles; no mask input — the static padded tail is masked
#   in-kernel (code only emitted when padding exists).  Per-lane partial sums
#   accumulate into a resident (1, 128) output; mean taken in the wrapper.
# ---------------------------------------------------------------------------
def _bce_kernel(x_ref, t_ref, acc_ref, *, n_valid):
    i = pl.program_id(0)

    @pl.when(i == 0)
    def _init():
        acc_ref[...] = jnp.zeros_like(acc_ref)

    x = x_ref[...].astype(jnp.float32)     # (TR, 128)
    t = t_ref[...].astype(jnp.float32)
    # numerically-stable BCE with logits: max(x,0) - x*t + log(1 + exp(-|x|))
    loss = jnp.maximum(x, 0.0) - x * t + jnp.log1p(jnp.exp(-jnp.abs(x)))

    if n_valid is not None:   # static: only emitted when the input was padded
        tr, lanes = x.shape
        row = jax.lax.broadcasted_iota(jnp.int32, x.shape, 0)
        lane = jax.lax.broadcasted_iota(jnp.int32, x.shape, 1)
        flat = (i * tr + row) * lanes + lane
        loss = jnp.where(flat < n_valid, loss, 0.0)

    # per-lane partial sums; final cross-lane reduce happens in the wrapper
    acc_ref[...] += jnp.sum(loss, axis=0, keepdims=True)


def bce_with_logits_loss(pred, target, tile_rows=2048, lanes=128):
    """pred, target: same shape; mean BCE-with-logits over all elements."""
    x = pred.reshape(-1)
    t = target.reshape(-1)
    n = x.shape[0]

    rows = -(-n // lanes)
    tile_rows = min(tile_rows, _round_up(rows, 8))
    rows_p = _round_up(rows, tile_rows)
    n_p = rows_p * lanes
    if n_p != n:
        x = jnp.pad(x, (0, n_p - n))
        t = jnp.pad(t, (0, n_p - n))
    x = x.reshape(rows_p, lanes)
    t = t.reshape(rows_p, lanes)

    # TODO(synk): optionally split the 1-D reduction grid across v7x's two
    # TensorCores with a leading "parallel" axis and per-core partial outputs.
    grid = (rows_p // tile_rows,)
    acc = pl.pallas_call(
        functools.partial(_bce_kernel, n_valid=(n if n_p != n else None)),
        out_shape=jax.ShapeDtypeStruct((1, lanes), jnp.float32),
        grid=grid,
        in_specs=[pl.BlockSpec((tile_rows, lanes), lambda i: (i, 0)),
                  pl.BlockSpec((tile_rows, lanes), lambda i: (i, 0))],
        out_specs=pl.BlockSpec((1, lanes), lambda i: (0, 0)),
        compiler_params=pltpu.CompilerParams(
            dimension_semantics=("arbitrary",)),
    )(x, t)
    return jnp.sum(acc) / jnp.float32(n)


# ---------------------------------------------------------------------------
# Loss "modules" (no learnable parameters) and the SegLoss wrapper
# ---------------------------------------------------------------------------
class CrossEntropySegLossPallas:
    def __init__(self, ignore_index=255):
        self.ignore_index = ignore_index

    def __call__(self, pred, target):
        return cross_entropy_seg_loss(pred, target, self.ignore_index)


class BCEWithLogitsLossPallas:
    def __call__(self, pred, target):
        return bce_with_logits_loss(pred, target)


class SegLoss:
    """Segmentation loss wrapper (mirrors the PyTorch SegLoss.forward)."""

    def __init__(self, loss):
        self.loss = loss

    def __call__(self, pred, target):
        assert len(target) == len(self.loss)
        res = [single_loss(**single_target)
               for single_target, single_loss in zip(target, self.loss)]
        return res


# ---------------------------------------------------------------------------
if __name__ == "__main__":
    key = jax.random.PRNGKey(0)
    k1, k2, k3, k4 = jax.random.split(key, 4)

    N, C, H, W = 2, 4, 16, 16
    # semantic head: NCHW logits + integer labels with some ignore pixels
    sem_logits = jax.random.normal(k1, (N, C, H, W), jnp.float32)
    sem_labels = jax.random.randint(k2, (N, H, W), 0, C).astype(jnp.int32)
    sem_labels = sem_labels.at[:, 0, :].set(255)  # ignore_index rows

    # binary aux head: NCHW single-channel logits + {0,1} mask
    aux_logits = jax.random.normal(k3, (N, 1, H, W), jnp.float32)
    aux_mask = (jax.random.uniform(k4, (N, 1, H, W)) > 0.5).astype(jnp.float32)

    seg_loss = SegLoss(loss=[CrossEntropySegLossPallas(ignore_index=255),
                             BCEWithLogitsLossPallas()])

    res = seg_loss(
        pred=None,  # unused, matching the PyTorch forward signature
        target=[{"pred": sem_logits, "target": sem_labels},
                {"pred": aux_logits, "target": aux_mask}],
    )
    res = jax.block_until_ready(res)

    # pure-JAX reference check
    logp = jax.nn.log_softmax(sem_logits.astype(jnp.float32), axis=1)
    valid = sem_labels != 255
    safe_lbl = jnp.where(valid, sem_labels, 0)
    picked = jnp.take_along_axis(logp, safe_lbl[:, None], axis=1)[:, 0]
    ce_ref = (jnp.sum(jnp.where(valid, -picked, 0.0))
              / jnp.maximum(jnp.sum(valid.astype(jnp.float32)), 1.0))
    xb = aux_logits.astype(jnp.float32)
    bce_ref = jnp.mean(jnp.maximum(xb, 0.0) - xb * aux_mask
                       + jnp.log1p(jnp.exp(-jnp.abs(xb))))

    assert all(jnp.isfinite(r) for r in res)
    assert jnp.allclose(res[0], ce_ref, rtol=1e-3, atol=1e-4), (res[0], ce_ref)
    assert jnp.allclose(res[1], bce_ref, rtol=1e-3, atol=1e-4), (res[1], bce_ref)
    print("KERNEL_OK")
</pallas_src>

<mosaic_0001>
module attributes {stable_mosaic.version = 11 : i64} {
  func.func @_ce_kernel(%arg0: i32, %arg1: i32, %arg2: memref<1x4x256xf32, #tpu.memory_space<vmem>>, %arg3: memref<1x1x256xi32, #tpu.memory_space<vmem>>, %arg4: memref<1x1x256xf32, #tpu.memory_space<vmem>>, %arg5: memref<1x1x256xf32, #tpu.memory_space<vmem>>) attributes {dimension_semantics = [#tpu.dimension_semantics<parallel>, #tpu.dimension_semantics<arbitrary>], iteration_bounds = array<i64: 2, 1>, scalar_prefetch = 0 : i64, scratch_operands = 0 : i64, tpu.core_type = #tpu.core_type<tc>, window_params = [{transform_indices = @transform_0, window_bounds = array<i64: 1, 4, 256>}, {transform_indices = @transform_1, window_bounds = array<i64: 1, 1, 256>}, {transform_indices = @transform_2, window_bounds = array<i64: 1, 1, 256>}, {transform_indices = @transform_3, window_bounds = array<i64: 1, 1, 256>}]} {
    %c0_i32 = arith.constant 0 : i32
    %0 = arith.cmpi eq, %arg1, %c0_i32 : i32
    %1 = arith.extui %0 : i1 to i32
    %c0_i32_0 = arith.constant 0 : i32
    %2 = arith.cmpi ne, %1, %c0_i32_0 : i32
    scf.if %2 {
      %cst_20 = arith.constant 0.000000e+00 : f32
      %41 = vector.broadcast %cst_20 : f32 to vector<1x1x256xf32>
      %c0_21 = arith.constant 0 : index
      %c0_22 = arith.constant 0 : index
      %c0_23 = arith.constant 0 : index
      %42 = vector.load %arg4[%c0_21, %c0_22, %c0_23] : memref<1x1x256xf32, #tpu.memory_space<vmem>>, vector<1x1x256xf32>
      tpu.vector_store %arg4[%c0_21, %c0_22, %c0_23], %41 {strides = array<i32>} : memref<1x1x256xf32, #tpu.memory_space<vmem>>, vector<1x1x256xf32>,
      %cst_24 = arith.constant 0.000000e+00 : f32
      %43 = vector.broadcast %cst_24 : f32 to vector<1x1x256xf32>
      %c0_25 = arith.constant 0 : index
      %c0_26 = arith.constant 0 : index
      %c0_27 = arith.constant 0 : index
      %44 = vector.load %arg5[%c0_25, %c0_26, %c0_27] : memref<1x1x256xf32, #tpu.memory_space<vmem>>, vector<1x1x256xf32>
      tpu.vector_store %arg5[%c0_25, %c0_26, %c0_27], %43 {strides = array<i32>} : memref<1x1x256xf32, #tpu.memory_space<vmem>>, vector<1x1x256xf32>,
    } else {
    }
    %c0 = arith.constant 0 : index
    %c0_1 = arith.constant 0 : index
    %c0_2 = arith.constant 0 : index
    %3 = vector.load %arg2[%c0, %c0_1, %c0_2] : memref<1x4x256xf32, #tpu.memory_space<vmem>>, vector<1x4x256xf32>
    %4 = vector.shape_cast %3 : vector<1x4x256xf32> to vector<4x256xf32>
    %c0_3 = arith.constant 0 : index
    %c0_4 = arith.constant 0 : index
    %c0_5 = arith.constant 0 : index
    %5 = vector.load %arg3[%c0_3, %c0_4, %c0_5] : memref<1x1x256xi32, #tpu.memory_space<vmem>>, vector<1x1x256xi32>
    %6 = vector.shape_cast %5 : vector<1x1x256xi32> to vector<1x256xi32>
    %cst = arith.constant dense<0xFF800000> : vector<256xf32>
    %7 = vector.multi_reduction <maximumf>, %4, %cst [0] : vector<4x256xf32> to vector<256xf32>
    %8 = vector.shape_cast %7 : vector<256xf32> to vector<1x256xf32>
    %9 = vector.broadcast %8 : vector<1x256xf32> to vector<4x256xf32>
    %10 = arith.subf %4, %9 : vector<4x256xf32>
    %11 = math.exp %10 : vector<4x256xf32>
    %cst_6 = arith.constant dense<0.000000e+00> : vector<256xf32>
    %12 = vector.multi_reduction <add>, %11, %cst_6 [0] : vector<4x256xf32> to vector<256xf32>
    %13 = vector.shape_cast %12 : vector<256xf32> to vector<1x256xf32>
    %14 = math.log %13 : vector<1x256xf32>
    %15 = tpu.iota {dimensions = array<i32: 0>} : vector<4x256xi32>
    %16 = vector.broadcast %6 : vector<1x256xi32> to vector<4x256xi32>
    %17 = arith.cmpi eq, %15, %16 : vector<4x256xi32>
    %18 = arith.extui %17 : vector<4x256xi1> to vector<4x256xi32>
    %19 = arith.sitofp %18 : vector<4x256xi32> to vector<4x256xf32>
    %20 = arith.mulf %19, %10 : vector<4x256xf32>
    %cst_7 = arith.constant dense<0.000000e+00> : vector<256xf32>
    %21 = vector.multi_reduction <add>, %20, %cst_7 [0] : vector<4x256xf32> to vector<256xf32>
    %22 = vector.shape_cast %21 : vector<256xf32> to vector<1x256xf32>
    %23 = arith.subf %14, %22 : vector<1x256xf32>
    %c255_i32 = arith.constant 255 : i32
    %24 = vector.broadcast %c255_i32 : i32 to vector<1x256xi32>
    %25 = arith.cmpi ne, %6, %24 : vector<1x256xi32>
    %26 = arith.extui %25 : vector<1x256xi1> to vector<1x256xi32>
    %27 = arith.sitofp %26 : vector<1x256xi32> to vector<1x256xf32>
    %c0_8 = arith.constant 0 : index
    %c0_9 = arith.constant 0 : index
    %c0_10 = arith.constant 0 : index
    %28 = vector.load %arg4[%c0_8, %c0_9, %c0_10] : memref<1x1x256xf32, #tpu.memory_space<vmem>>, vector<1x1x256xf32>
    %29 = vector.shape_cast %28 : vector<1x1x256xf32> to vector<1x256xf32>
    %30 = arith.mulf %23, %27 : vector<1x256xf32>
    %31 = arith.addf %29, %30 : vector<1x256xf32>
    %c0_11 = arith.constant 0 : index
    %c0_12 = arith.constant 0 : index
    %c0_13 = arith.constant 0 : index
    %32 = vector.load %arg4[%c0_11, %c0_12, %c0_13] : memref<1x1x256xf32, #tpu.memory_space<vmem>>, vector<1x1x256xf32>
    %33 = vector.shape_cast %32 : vector<1x1x256xf32> to vector<1x256xf32>
    %34 = vector.shape_cast %31 : vector<1x256xf32> to vector<1x1x256xf32>
    tpu.vector_store %arg4[%c0_11, %c0_12, %c0_13], %34 {strides = array<i32>} : memref<1x1x256xf32, #tpu.memory_space<vmem>>, vector<1x1x256xf32>,
    %c0_14 = arith.constant 0 : index
    %c0_15 = arith.constant 0 : index
    %c0_16 = arith.constant 0 : index
    %35 = vector.load %arg5[%c0_14, %c0_15, %c0_16] : memref<1x1x256xf32, #tpu.memory_space<vmem>>, vector<1x1x256xf32>
    %36 = vector.shape_cast %35 : vector<1x1x256xf32> to vector<1x256xf32>
    %37 = arith.addf %36, %27 : vector<1x256xf32>
    %c0_17 = arith.constant 0 : index
    %c0_18 = arith.constant 0 : index
    %c0_19 = arith.constant 0 : index
    %38 = vector.load %arg5[%c0_17, %c0_18, %c0_19] : memref<1x1x256xf32, #tpu.memory_space<vmem>>, vector<1x1x256xf32>
    %39 = vector.shape_cast %38 : vector<1x1x256xf32> to vector<1x256xf32>
    %40 = vector.shape_cast %37 : vector<1x256xf32> to vector<1x1x256xf32>
    tpu.vector_store %arg5[%c0_17, %c0_18, %c0_19], %40 {strides = array<i32>} : memref<1x1x256xf32, #tpu.memory_space<vmem>>, vector<1x1x256xf32>,
    return
  }
  func.func @transform_0(%arg0: i32, %arg1: i32) -> (i32, i32, i32) {
    %c0_i32 = arith.constant 0 : i32
    %c0_i32_0 = arith.constant 0 : i32
    return %arg0, %c0_i32, %arg1 : i32, i32, i32
  }
  func.func @transform_1(%arg0: i32, %arg1: i32) -> (i32, i32, i32) {
    %c0_i32 = arith.constant 0 : i32
    %c0_i32_0 = arith.constant 0 : i32
    return %arg0, %c0_i32, %arg1 : i32, i32, i32
  }
  func.func @transform_2(%arg0: i32, %arg1: i32) -> (i32, i32, i32) {
    %c0_i32 = arith.constant 0 : i32
    %c0_i32_0 = arith.constant 0 : i32
    %c0_i32_1 = arith.constant 0 : i32
    return %arg0, %c0_i32, %c0_i32_0 : i32, i32, i32
  }
  func.func @transform_3(%arg0: i32, %arg1: i32) -> (i32, i32, i32) {
    %c0_i32 = arith.constant 0 : i32
    %c0_i32_0 = arith.constant 0 : i32
    %c0_i32_1 = arith.constant 0 : i32
    return %arg0, %c0_i32, %c0_i32_0 : i32, i32, i32
  }
}

</mosaic_0001>

<llo_original>
// kernel: tpu_custom_call.1
$region0: #{tpu_custom_call.1}
  #allocation0 [shape = 'u32[]', space=smem, size = 0x4, offset = 0x4, fixed_abs, tag = 'smem constant byte address 0x4 - core index']
  #allocation1 [shape = 'u32[72,128]{1,0:T(1,128)}', space=vmem, size = 0x9000, scoped, tag = 'internal scratch']
  %s0 = inlined_call_operand.hbm [shape: f32[2,4,256], index: 0, kind: input, shape index: {}]
  %s1 = inlined_call_operand.hbm [shape: s32[2,1,256], index: 1, kind: input, shape index: {}]
  %s2 = inlined_call_operand.hbm [shape: f32[2,1,256], index: 2, kind: output, shape index: {0}]
  %s3 = inlined_call_operand.hbm [shape: f32[2,1,256], index: 3, kind: output, shape index: {1}]
  %4 = xla_tuple %s2, %s3
  %s5 = sld [smem:[#allocation0]]
  $region61: #{tpu_custom_call.1} parent=0
    _
  %s7 = ssub.s32 1, %s5
  %s8 = scalar_select 0, %s7, %s5
  $region1: #{tpu_custom_call.1} parent=0
    #allocation2 [shape = 'u8[8192]{0}', space=vmem, size = 0x2000, scoped, tag = 'input window, operand 0']
    #allocation3 [shape = 's32[2]{0}', space=sflag, size = 0x8, scoped, tag = 'scoped memory for tpu_custom_call.1']
    #allocation4 [shape = 's32[2]{0}', space=sflag, size = 0x8, scoped, tag = 'scoped memory for tpu_custom_call.1']
    #allocation5 [shape = 'u8[2048]{0}', space=vmem, size = 0x800, scoped, tag = 'input window, operand 1']
    #allocation6 [shape = 's32[2]{0}', space=sflag, size = 0x8, scoped, tag = 'scoped memory for tpu_custom_call.1']
    #allocation7 [shape = 'u8[2048]{0}', space=vmem, size = 0x800, scoped, tag = 'output window, operand 0']
    #allocation8 [shape = 'u8[2048]{0}', space=vmem, size = 0x800, scoped, tag = 'output window, operand 1']
    #allocation9 [shape = 's32[2]{0}', space=sflag, size = 0x8, scoped, tag = 'scoped memory for tpu_custom_call.1']
    %9 = vsyncpa [#allocation3], 0
    %s10 = scalar_lea.sflag [#allocation3], 1
    %11 = vsyncpa %s10, 0
    %12 = vsyncpa [#allocation6], 0
    %s13 = scalar_lea.sflag [#allocation6], 1
    %14 = vsyncpa %s13, 0
    %15 = vsyncpa [#allocation4], 0
    %s16 = scalar_lea.sflag [#allocation4], 1
    %17 = vsyncpa %s16, 0
    %18 = vsyncpa [#allocation9], 0
    %s19 = scalar_lea.sflag [#allocation9], 1
    %20 = vsyncpa %s19, 0
    loop: start=0, step=1, limit=4
    $region2: #{tpu_custom_call.1} parent=1 // loop_pre_header
      _
    $region3: #{tpu_custom_call.1} parent=1 // loop_header
      %s22 = sphi 0, %s26
      %p23 = scmp.ge.s32.totalorder %s22, 4
      %s29 = sphi 0, %s41
      %s30 = sphi 0, %s37
      %s31 = sphi 0, %s29
      %s32 = sphi 0, %s30
      %s33 = sphi 0, %s31
      %s34 = sphi 0, %s32
      %s46 = sphi 0, %s48
      %s49 = sphi 0, %s46
      %s50 = sphi 0, %s49
      %s66 = sphi 0, %s50
      %s74 = sphi 0, %s76
      %s77 = sphi 0, %s74
      %s78 = sphi 0, %s77
      %s94 = sphi 0, %s78
      %s100 = sphi 0, %s102
      %s103 = sphi 0, %s100
      %s104 = sphi 0, %s103
      %s120 = sphi 0, %s104
      %s126 = sphi 0, %s128
      %s129 = sphi 0, %s126
      %s130 = sphi 0, %s129
      %s146 = sphi 0, %s130
    $region4: #{tpu_custom_call.1} parent=1 // loop_header_branch
      %25 = sbr.rel (%p23) target = $region8
    $region5: #{tpu_custom_call.1} parent=1 // loop_body
      %s27 = ssub.s32 %s22, 1
      %s28 = ssub.s32 %s22, 2
      %s35 = sadd.s32 1, %s30
      %p36 = scmp.ge.s32.totalorder %s35, 1
      %s37 = scalar_select %p36, 0, %s35
      %s38 = sadd.s32 1, %s29
      %s39 = scalar_select %p36, %s38, %s29
      %p40 = scmp.ge.s32.totalorder %s39, 2
      %s41 = scalar_select %p40, 0, %s39
      %s42 = ssub.s32 %s29, %s41
      %s43 = ssub.s32 %s30, %s37
      %s44 = sor.u32 %s42, %s43
      %p45 = scmp.eq.s32.totalorder %s44, 0
      %s47 = sadd.s32 %s46, 1
      %s48 = scalar_select %p45, %s46, %s47
      %p51 = pneg %p45
      %p52 = scmp.eq.s32.totalorder %s22, 1
      %p53 = por %p51, %p52
      %p54 = scmp.ne.s32.totalorder %s46, %s49
      %p55 = scmp.eq.s32.totalorder %s22, 0
      %p56 = por %p54, %p55
      %p57 = scmp.ne.s32.totalorder %s46, %s49
      %p58 = scmp.eq.s32.totalorder %s27, 1
      %p59 = por %p57, %p58
      %p60 = scmp.ne.s32.totalorder %s49, %s50
      %p61 = scmp.eq.s32.totalorder %s27, 0
      %p62 = por %p60, %p61
      %p63 = scmp.ne.s32.totalorder %s49, %s50
      %p64 = scmp.eq.s32.totalorder %s28, 1
      %p65 = por %p63, %p64
      %p67 = scmp.ne.s32.totalorder %s50, %s66
      %p68 = scmp.eq.s32.totalorder %s28, 0
      %p69 = por %p67, %p68
      %s70 = ssub.s32 %s29, %s41
      %s71 = ssub.s32 %s30, %s37
      %s72 = sor.u32 %s70, %s71
      %p73 = scmp.eq.s32.totalorder %s72, 0
      %s75 = sadd.s32 %s74, 1
      %s76 = scalar_select %p73, %s74, %s75
      %p79 = pneg %p73
      %p80 = scmp.eq.s32.totalorder %s22, 1
      %p81 = por %p79, %p80
      %p82 = scmp.ne.s32.totalorder %s74, %s77
      %p83 = scmp.eq.s32.totalorder %s22, 0
      %p84 = por %p82, %p83
      %p85 = scmp.ne.s32.totalorder %s74, %s77
      %p86 = scmp.eq.s32.totalorder %s27, 1
      %p87 = por %p85, %p86
      %p88 = scmp.ne.s32.totalorder %s77, %s78
      %p89 = scmp.eq.s32.totalorder %s27, 0
      %p90 = por %p88, %p89
      %p91 = scmp.ne.s32.totalorder %s77, %s78
      %p92 = scmp.eq.s32.totalorder %s28, 1
      %p93 = por %p91, %p92
      %p95 = scmp.ne.s32.totalorder %s78, %s94
      %p96 = scmp.eq.s32.totalorder %s28, 0
      %p97 = por %p95, %p96
      %s98 = ssub.s32 %s29, %s41
      %p99 = scmp.eq.s32.totalorder %s98, 0
      %s101 = sadd.s32 %s100, 1
      %s102 = scalar_select %p99, %s100, %s101
      %p105 = pneg %p99
      %p106 = scmp.eq.s32.totalorder %s22, 1
      %p107 = por %p105, %p106
      %p108 = scmp.ne.s32.totalorder %s100, %s103
      %p109 = scmp.eq.s32.totalorder %s22, 0
      %p110 = por %p108, %p109
      %p111 = scmp.ne.s32.totalorder %s100, %s103
      %p112 = scmp.eq.s32.totalorder %s27, 1
      %p113 = por %p111, %p112
      %p114 = scmp.ne.s32.totalorder %s103, %s104
      %p115 = scmp.eq.s32.totalorder %s27, 0
      %p116 = por %p114, %p115
      %p117 = scmp.ne.s32.totalorder %s103, %s104
      %p118 = scmp.eq.s32.totalorder %s28, 1
      %p119 = por %p117, %p118
      %p121 = scmp.ne.s32.totalorder %s104, %s120
      %p122 = scmp.eq.s32.totalorder %s28, 0
      %p123 = por %p121, %p122
      %s124 = ssub.s32 %s29, %s41
      %p125 = scmp.eq.s32.totalorder %s124, 0
      %s127 = sadd.s32 %s126, 1
      %s128 = scalar_select %p125, %s126, %s127
      %p131 = pneg %p125
      %p132 = scmp.eq.s32.totalorder %s22, 1
      %p133 = por %p131, %p132
      %p134 = scmp.ne.s32.totalorder %s126, %s129
      %p135 = scmp.eq.s32.totalorder %s22, 0
      %p136 = por %p134, %p135
      %p137 = scmp.ne.s32.totalorder %s126, %s129
      %p138 = scmp.eq.s32.totalorder %s27, 1
      %p139 = por %p137, %p138
      %p140 = scmp.ne.s32.totalorder %s129, %s130
      %p141 = scmp.eq.s32.totalorder %s27, 0
      %p142 = por %p140, %p141
      %p143 = scmp.ne.s32.totalorder %s129, %s130
      %p144 = scmp.eq.s32.totalorder %s28, 1
      %p145 = por %p143, %p144
      %p147 = scmp.ne.s32.totalorder %s130, %s146
      %p148 = scmp.eq.s32.totalorder %s28, 0
      %p149 = por %p147, %p148
      %p150 = scmp.le.s32.totalorder 1, %s22
      %p151 = scmp.lt.s32.totalorder %s22, 3
      %p152 = pnand %p150, %p151
      %p153 = pneg %p152
      // Predicated region
      $region9: #{tpu_custom_call.1} parent=5 // pred_check
        _
      $region10: #{tpu_custom_call.1} parent=5 // pred_check_branch
        %155 = sbr.rel (%p152) target = $region12
      $region11: #{tpu_custom_call.1} parent=5 // pred_region
        %s156 = ssub.s32 %s22, 1
      $region12: #{tpu_custom_call.1} parent=5 // pred_fallthru
        _
      %p157 = scmp.lt.s32.totalorder %s22, 2
      // Predicated region
      $region13: #{tpu_custom_call.1} parent=5 // pred_check
        %p158 = pneg %p157
      $region14: #{tpu_custom_call.1} parent=5 // pred_check_branch
        %160 = sbr.rel (%p158) target = $region16
      $region15: #{tpu_custom_call.1} parent=5 // pred_region
        // Predicated region
        $region17: #{tpu_custom_call.1} parent=15 // pred_check
          %p161 = pneg %p56
        $region18: #{tpu_custom_call.1} parent=15 // pred_check_branch
          %163 = sbr.rel (%p161) target = $region20
        $region19: #{tpu_custom_call.1} parent=15 // pred_region
          %s164 = sand.u32 %s46, 1
          %s165 = scalar_lea.sflag [#allocation3], %s164
          %s166 = sand.u32 %s46, 1
          %s167 = smul.addr %s166, 8
          %s168 = scalar_lea.vmem [#allocation2], %s167
          %s169 = smul.u32 2, %s30
          %171 = vsyncadd %s165, 0
          %s172 = smul.addr %s29, 2
          %s173 = sadd.s32 %s169, %s172
          %s174 = smul.addr %s173, 4
          %s175 = scalar_lea.hbm %s0, %s174
          %s177 = sshll.u32 %s175, 4
          %s178 = int_to_ptr.hbm [resolvable:$true] %s177
          %s179 = sshll.u32 %s168, 4
          %s180 = int_to_ptr.vmem [resolvable:$true] %s179
          %182 = dma.hbm_to_vmem [thread:$0]  %s178, 128, %s180, %s165
        $region20: #{tpu_custom_call.1} parent=15 // pred_fallthru
          _
        // Predicated region
        $region21: #{tpu_custom_call.1} parent=15 // pred_check
          %p183 = pneg %p84
        $region22: #{tpu_custom_call.1} parent=15 // pred_check_branch
          %185 = sbr.rel (%p183) target = $region24
        $region23: #{tpu_custom_call.1} parent=15 // pred_region
          %s186 = sand.u32 %s74, 1
          %s187 = scalar_lea.sflag [#allocation6], %s186
          %s188 = sand.u32 %s74, 1
          %s189 = smul.addr %s188, 2
          %s190 = scalar_lea.vmem [#allocation5], %s189
          %s191 = smul.u32 2, %s30
          %193 = vsyncadd %s187, 0
          %s194 = smul.addr %s29, 2
          %s195 = sadd.s32 %s191, %s194
          %s196 = scalar_lea.hbm %s1, %s195
          %s198 = sshll.u32 %s196, 4
          %s199 = int_to_ptr.hbm [resolvable:$true] %s198
          %s200 = sshll.u32 %s190, 4
          %s201 = int_to_ptr.vmem [resolvable:$true] %s200
          %203 = dma.hbm_to_vmem [thread:$0]  %s199, 32, %s201, %s187
        $region24: #{tpu_custom_call.1} parent=15 // pred_fallthru
          _
      $region16: #{tpu_custom_call.1} parent=5 // pred_fallthru
        _
      %p204 = scmp.le.s32.totalorder 1, %s22
      %p205 = scmp.lt.s32.totalorder %s22, 3
      %p206 = pnand %p204, %p205
      %p207 = pneg %p206
      // Predicated region
      $region25: #{tpu_custom_call.1} parent=5 // pred_check
        _
      $region26: #{tpu_custom_call.1} parent=5 // pred_check_branch
        %209 = sbr.rel (%p206) target = $region28
      $region27: #{tpu_custom_call.1} parent=5 // pred_region
        %s210 = ssub.s32 %s22, 1
        %s211 = sand.u32 %s49, 1
        %s212 = scalar_lea.sflag [#allocation3], %s211
        %s213 = sand.u32 %s49, 1
        %s214 = smul.addr %s213, 8
        %s215 = scalar_lea.vmem [#allocation2], %s214
        // Predicated region
        $region29: #{tpu_custom_call.1} parent=27 // pred_check
          %p216 = pneg %p62
        $region30: #{tpu_custom_call.1} parent=27 // pred_check_branch
          %218 = sbr.rel (%p216) target = $region32
        $region31: #{tpu_custom_call.1} parent=27 // pred_region
          %220 = dma.done %s212, 128
        $region32: #{tpu_custom_call.1} parent=27 // pred_fallthru
          _
        %s221 = sand.u32 %s77, 1
        %s222 = scalar_lea.sflag [#allocation6], %s221
        %s223 = sand.u32 %s77, 1
        %s224 = smul.addr %s223, 2
        %s225 = scalar_lea.vmem [#allocation5], %s224
        // Predicated region
        $region33: #{tpu_custom_call.1} parent=27 // pred_check
          %p226 = pneg %p90
        $region34: #{tpu_custom_call.1} parent=27 // pred_check_branch
          %228 = sbr.rel (%p226) target = $region36
        $region35: #{tpu_custom_call.1} parent=27 // pred_region
          %230 = dma.done %s222, 32
        $region36: #{tpu_custom_call.1} parent=27 // pred_fallthru
          _
        %s231 = sand.u32 %s49, 1
        %s232 = scalar_lea.sflag [#allocation3], %s231
        %s233 = sand.u32 %s49, 1
        %s234 = smul.addr %s233, 8
        %s235 = scalar_lea.vmem [#allocation2], %s234
        %p236 = pneg %p62
        %p237 = pneg %p59
        %s238 = sand.u32 %s77, 1
        %s239 = scalar_lea.sflag [#allocation6], %s238
        %s240 = sand.u32 %s77, 1
        %s241 = smul.addr %s240, 2
        %s242 = scalar_lea.vmem [#allocation5], %s241
        %p243 = pneg %p90
        %p244 = pneg %p87
        %p245 = pneg %p116
        %p246 = pneg %p113
        %s247 = sand.u32 %s103, 1
        %s248 = scalar_lea.sflag [#allocation4], %s247
        %s249 = sand.u32 %s103, 1
        %s250 = smul.addr %s249, 2
        %s251 = scalar_lea.vmem [#allocation7], %s250
        %p252 = pneg %p142
        %p253 = pneg %p139
        %s254 = sand.u32 %s129, 1
        %s255 = scalar_lea.sflag [#allocation9], %s254
        %s256 = sand.u32 %s129, 1
        %s257 = smul.addr %s256, 2
        %s258 = scalar_lea.vmem [#allocation8], %s257
        %s259 = smul.u32 2, %s32
        %s260 = smul.u32 2, %s32
        %p261 = scmp.eq.s32.totalorder %s32, 0
        // Predicated region
        $region37: #{tpu_custom_call.1} parent=27 // pred_check
          %p262 = pneg %p261
        $region38: #{tpu_custom_call.1} parent=27 // pred_check_branch
          %264 = sbr.rel (%p262) target = $region40
        $region39: #{tpu_custom_call.1} parent=27 // pred_region
          %v265 = vlaneseq
          %vm266 = vcmp.ge.s32.totalorder %v265, 0
          %vm267 = vcmp.lt.s32.totalorder %v265, 256
          %vm268 = vmand %vm266, %vm267
          %269 = vst.msk [vmem:[%s251] sm:$0x3] %vm268, 0.0
          %270 = vst.msk [vmem:[%s258] sm:$0x3] %vm268, 0.0
        $region40: #{tpu_custom_call.1} parent=27 // pred_fallthru
          _
        %v271 = vld [vmem:[%s215] sm:$0xff]
        %v272 = vld [vmem:[%s225] sm:$0x3]
        %274 = vst [vmem:[#allocation1] ss:$2 sm:$0xff] %v271
        %v275 = vld.sshfl [vmem:[#allocation1] sm:$0xff pattern:$0x75316420]
        %v276 = vld.sshfl [vmem:[#allocation1 + $0x8] sm:$0xff pattern:$0x75316420]
        %vm279 = vcmask 1043456
        %v280 = vsel %vm279, %v275, -inf
        %v281 = vrot.slane %v280, 4
        %v282 = vmax.f32 %v280, %v281
        %v283 = vrot.slane %v282, 2
        %v284 = vmax.f32 %v282, %v283
        %v285 = vrot.slane %v284, 1
        %v286 = vmax.f32 %v284, %v285
        %v287 = vsel %vm279, %v276, -inf
        %v288 = vrot.slane %v287, 4
        %v289 = vmax.f32 %v287, %v288
        %v290 = vrot.slane %v289, 2
        %v291 = vmax.f32 %v289, %v290
        %v292 = vrot.slane %v291, 1
        %v293 = vmax.f32 %v291, %v292
        %v296 = vrot.slane %v293, 4
        %v297 = vsel %vm279, %v286, %v296
        %v299 = vsub.f32 %v271, %v297
        %v300 = vmul.f32 %v299, 1.442695
        %v301 = vpow.pop %v300
        %303 = vst [vmem:[#allocation1] ss:$2 sm:$0xff] %v301
        %v304 = vld.sshfl [vmem:[#allocation1] sm:$0xff pattern:$0x75316420]
        %v305 = vld.sshfl [vmem:[#allocation1 + $0x8] sm:$0xff pattern:$0x75316420]
        %v308 = vsel %vm279, %v304, 0.0
        %v309 = vrot.slane %v308, 4
        %v310 = vadd.f32 %v308, %v309
        %v311 = vrot.slane %v310, 2
        %v312 = vadd.f32 %v310, %v311
        %v313 = vrot.slane %v312, 1
        %v314 = vadd.f32 %v312, %v313
        %v315 = vsel %vm279, %v305, 0.0
        %v316 = vrot.slane %v315, 4
        %v317 = vadd.f32 %v315, %v316
        %v318 = vrot.slane %v317, 2
        %v319 = vadd.f32 %v317, %v318
        %v320 = vrot.slane %v319, 1
        %v321 = vadd.f32 %v319, %v320
        %v322 = vlog2.pop %v314
        %v323 = vmul.f32 %v322, 0.6931472
        %v324 = vlog2.pop %v321
        %v325 = vmul.f32 %v324, 0.6931472
        %v326 = vlaneseq
        %v327 = vshrl.u32 %v326, 7
        %v328 = vperm.slane %v272, 0
        %v329 = vperm.slane %v272, 1
        %vm330 = vcmp.eq.s32.totalorder %v327, %v328
        %vm331 = vcmp.eq.s32.totalorder %v327, %v329
        %v332 = vsel %vm330, 1, 0
        %v333 = vsel %vm331, 1, 0
        %v334 = vcvt.s32.f32 %v332
        %v335 = vcvt.s32.f32 %v333
        %337 = vst [vmem:[#allocation1] ss:$2 sm:$0xff] %v299
        %v338 = vld.sshfl [vmem:[#allocation1] sm:$0xff pattern:$0x75316420]
        %v339 = vld.sshfl [vmem:[#allocation1 + $0x8] sm:$0xff pattern:$0x75316420]
        %v342 = vmul.f32 %v334, %v338
        %v343 = vmul.f32 %v335, %v339
        %v344 = vsel %vm279, %v342, 0.0
        %v345 = vrot.slane %v344, 4
        %v346 = vadd.f32 %v344, %v345
        %v347 = vrot.slane %v346, 2
        %v348 = vadd.f32 %v346, %v347
        %v349 = vrot.slane %v348, 1
        %v350 = vadd.f32 %v348, %v349
        %v351 = vsel %vm279, %v343, 0.0
        %v352 = vrot.slane %v351, 4
        %v353 = vadd.f32 %v351, %v352
        %v354 = vrot.slane %v353, 2
        %v355 = vadd.f32 %v353, %v354
        %v356 = vrot.slane %v355, 1
        %v357 = vadd.f32 %v355, %v356
        %v358 = vsub.f32 %v323, %v350
        %v359 = vsub.f32 %v325, %v357
        %vm360 = vcmp.ne.s32.totalorder %v272, 255
        %v361 = vsel %vm360, 1, 0
        %v362 = vcvt.s32.f32 %v361
        %v363 = vld [vmem:[%s251] sm:$0x3]
        %v365 = vperm.slane %v362, 0
        %v366 = vperm.slane %v362, 1
        %v369 = vmul.f32 %v358, %v365
        %v370 = vmul.f32 %v359, %v366
        %v373 = vrot.slane %v370, 7
        %vm374 = vcmask 1040384
        %v375 = vsel %vm374, %v369, %v373
        %v377 = vadd.f32 %v363, %v375
        %v378 = vlaneseq
        %vm379 = vcmp.ge.s32.totalorder %v378, 0
        %vm380 = vcmp.lt.s32.totalorder %v378, 256
        %vm381 = vmand %vm379, %vm380
        %382 = vst.msk [vmem:[%s251] sm:$0x3] %vm381, %v377
        %v383 = vld [vmem:[%s258] sm:$0x3]
        %v384 = vadd.f32 %v383, %v362
        %385 = vst.msk [vmem:[%s258] sm:$0x3] %vm381, %v384
        %s386 = sand.u32 %s103, 1
        %s387 = scalar_lea.sflag [#allocation4], %s386
        %s388 = sand.u32 %s103, 1
        %s389 = smul.addr %s388, 2
        %s390 = scalar_lea.vmem [#allocation7], %s389
        %s391 = sand.u32 %s129, 1
        %s392 = scalar_lea.sflag [#allocation9], %s391
        %s393 = sand.u32 %s129, 1
        %s394 = smul.addr %s393, 2
        %s395 = scalar_lea.vmem [#allocation8], %s394
        // Predicated region
        $region41: #{tpu_custom_call.1} parent=27 // pred_check
          %p396 = pneg %p113
        $region42: #{tpu_custom_call.1} parent=27 // pred_check_branch
          %398 = sbr.rel (%p396) target = $region44
        $region43: #{tpu_custom_call.1} parent=27 // pred_region
          %400 = vsyncadd %s387, 0
          %s401 = smul.addr %s31, 2
          %s402 = scalar_lea.hbm %s2, %s401
          %s404 = sshll.u32 %s390, 4
          %s405 = int_to_ptr.vmem [resolvable:$true] %s404
          %s406 = sshll.u32 %s402, 4
          %s407 = int_to_ptr.hbm [resolvable:$true] %s406
          %409 = dma.vmem_to_hbm [thread:$0]  %s405, 32, %s407, %s387
        $region44: #{tpu_custom_call.1} parent=27 // pred_fallthru
          _
        // Predicated region
        $region45: #{tpu_custom_call.1} parent=27 // pred_check
          %p410 = pneg %p139
        $region46: #{tpu_custom_call.1} parent=27 // pred_check_branch
          %412 = sbr.rel (%p410) target = $region48
        $region47: #{tpu_custom_call.1} parent=27 // pred_region
          %414 = vsyncadd %s392, 0
          %s415 = smul.addr %s31, 2
          %s416 = scalar_lea.hbm %s3, %s415
          %s418 = sshll.u32 %s395, 4
          %s419 = int_to_ptr.vmem [resolvable:$true] %s418
          %s420 = sshll.u32 %s416, 4
          %s421 = int_to_ptr.hbm [resolvable:$true] %s420
          %423 = dma.vmem_to_hbm [thread:$0]  %s419, 32, %s421, %s392
        $region48: #{tpu_custom_call.1} parent=27 // pred_fallthru
          _
      $region28: #{tpu_custom_call.1} parent=5 // pred_fallthru
        _
      %p424 = scmp.le.s32.totalorder 2, %s22
      // Predicated region
      $region49: #{tpu_custom_call.1} parent=5 // pred_check
        %p425 = pneg %p424
      $region50: #{tpu_custom_call.1} parent=5 // pred_check_branch
        %427 = sbr.rel (%p425) target = $region52
      $region51: #{tpu_custom_call.1} parent=5 // pred_region
        %s428 = ssub.s32 %s22, 2
        // Predicated region
        $region53: #{tpu_custom_call.1} parent=51 // pred_check
          %p429 = pneg %p119
        $region54: #{tpu_custom_call.1} parent=51 // pred_check_branch
          %431 = sbr.rel (%p429) target = $region56
        $region55: #{tpu_custom_call.1} parent=51 // pred_region
          %s432 = sand.u32 %s104, 1
          %s433 = scalar_lea.sflag [#allocation4], %s432
          %s434 = sand.u32 %s104, 1
          %s435 = smul.addr %s434, 2
          %s436 = scalar_lea.vmem [#allocation7], %s435
          %438 = dma.done %s433, 32
        $region56: #{tpu_custom_call.1} parent=51 // pred_fallthru
          _
        // Predicated region
        $region57: #{tpu_custom_call.1} parent=51 // pred_check
          %p439 = pneg %p145
        $region58: #{tpu_custom_call.1} parent=51 // pred_check_branch
          %441 = sbr.rel (%p439) target = $region60
        $region59: #{tpu_custom_call.1} parent=51 // pred_region
          %s442 = sand.u32 %s130, 1
          %s443 = scalar_lea.sflag [#allocation9], %s442
          %s444 = sand.u32 %s130, 1
          %s445 = smul.addr %s444, 2
          %s446 = scalar_lea.vmem [#allocation8], %s445
          %448 = dma.done %s443, 32
        $region60: #{tpu_custom_call.1} parent=51 // pred_fallthru
          _
      $region52: #{tpu_custom_call.1} parent=5 // pred_fallthru
        _
    $region6: #{tpu_custom_call.1} parent=1 // loop_footer
      %s26 = sadd.s32 1, %s22
    $region7: #{tpu_custom_call.1} parent=1 // loop_footer_branch
      %21 = sbr.rel target = $region3
    $region8: #{tpu_custom_call.1} parent=1 // loop_exit
      _
    %449 = vsyncpa [#allocation3], 1
    %s450 = scalar_lea.sflag [#allocation3], 1
    %451 = vsyncpa %s450, 1
    %452 = vsyncpa [#allocation6], 1
    %s453 = scalar_lea.sflag [#allocation6], 1
    %454 = vsyncpa %s453, 1
    %455 = vsyncpa [#allocation4], 1
    %s456 = scalar_lea.sflag [#allocation4], 1
    %457 = vsyncpa %s456, 1
    %458 = vsyncpa [#allocation9], 1
    %s459 = scalar_lea.sflag [#allocation9], 1
    %460 = vsyncpa %s459, 1

</llo_original>
